<compile_context>
chip_gen: v6e
topology: v6e:2x2x1
jax: 0.10.0
libtpu: 0.0.40
codegen_flags: <defaults>
</compile_context>

<pallas_src>
import functools

import jax
import jax.numpy as jnp
from jax.experimental import pallas as pl
from jax.experimental.pallas import tpu as pltpu


# ---------------------------------------------------------------------------
# Kernel
# ---------------------------------------------------------------------------
def _transition_kernel(x_ref, scale_ref, shift_ref, w_ref, o_ref, *,
                       split_halves, half_c, matmul_dtype):
    # x_ref:   (T, W2p, 2C)  rows = flattened (n, h); lanes pack the two horizontally
    #          adjacent pixels' channels side by side: [even-pixel C | odd-pixel C].
    # scale_ref/shift_ref: (1, 2C) folded BN affine (per channel, tiled twice).
    # w_ref:   duplicated path: (2C, C_out_pad) = 0.25 * [Wc ; Wc]  (horiz pool folded in)
    #          split path     : (C,  C_out_pad) = Wc               (0.25 folded into affine)
    # o_ref:   (T//2, W2p, C_out_pad)
    x = x_ref[...]
    h = jnp.maximum(x * scale_ref[...] + shift_ref[...], 0.0)       # BN affine + ReLU (VPU)
    t, w2, c2 = h.shape
    if split_halves:
        # Horizontal 2-sum on the VPU; half_c % 128 == 0 so the lane slices are aligned.
        h = h[..., :half_c] + h[..., half_c:]
        c2 = half_c
    hv = h.reshape(t // 2, 2, w2, c2)                                # free leading-dim split
    pooled = hv[:, 0, :, :] + hv[:, 1, :, :]                         # vertical 2-sum
    y = jnp.dot(pooled.reshape((t // 2) * w2, c2).astype(matmul_dtype),
                w_ref[...],
                preferred_element_type=jnp.float32)                  # 1x1 conv on the MXU
    o_ref[...] = y.reshape(t // 2, w2, -1).astype(o_ref.dtype)


# ---------------------------------------------------------------------------
# Tiling helpers
# ---------------------------------------------------------------------------
def _round_up(x, m):
    return ((x + m - 1) // m) * m


def _cdiv(a, b):
    return -(-a // b)


def _vmem_budget_bytes():
    """(footprint budget, scoped vmem limit) sized from this chip's VMEM capacity."""
    cap = 64 * 1024 * 1024  # conservative default = v7x per-TensorCore VMEM
    try:
        info = pltpu.get_tpu_info()
        c = getattr(info, "vmem_capacity_bytes", None)
        if c:
            cap = int(c)
    except Exception:
        pass
    budget = min(int(cap * 0.45), 56 * 1024 * 1024)
    limit = min(int(cap * 0.70), 100 * 1024 * 1024)
    return budget, limit


def _choose_row_tile(rows, w2p, c2p, c_out_pad, k_dim, budget_bytes):
    """Largest even row tile whose footprint (double-buffered I/O + weight +
    in-kernel temporaries h/pooled/y) fits the budget. Returns (tile_rows, steps)."""
    in_row = w2p * c2p * 4                   # f32 bytes of one input row in VMEM
    out_row = w2p * c_out_pad * 4            # f32 bytes of one pooled output row
    w_bytes = 2 * _round_up(k_dim, 8) * c_out_pad * 4
    # footprint(t) ~ 2*in + 2*out (double buffers) + 1.5*in + 1*out (temporaries)
    per_row = 3.5 * in_row + 1.5 * out_row
    t_max = int((budget_bytes - w_bytes) // per_row) if budget_bytes > w_bytes else 0
    t_max -= t_max % 2
    t_max = min(t_max, _round_up(rows, 2))
    if t_max < 2:
        # TODO(synk): extremely large W2*C layers would need a secondary split along
        # W2 / C_out; not needed for DenseNet-sized transition layers.
        raise ValueError("TransitionLayer row-pair tile does not fit the VMEM budget.")
    num_steps = max(1, _cdiv(rows, t_max))
    if num_steps > 1 and num_steps % 2 == 1:
        num_steps += 1                       # even step count -> balanced v7x megacore split
    trr = _round_up(_cdiv(rows, num_steps), 2)
    return trr, num_steps


# ---------------------------------------------------------------------------
# NHWC fast path (no relayout passes)
# ---------------------------------------------------------------------------
def transition_layer_nhwc(x_nhwc, scale, shift, conv_w, *, use_bf16_matmul=False):
    """Fused BN(affine) -> ReLU -> 1x1 conv -> 2x2/2 avg-pool on NHWC input.

    scale/shift are the folded BatchNorm affine (scale = gamma*rsqrt(var+eps),
    shift = beta - mean*scale).  Returns NHWC (N, H//2, W//2, C_out).  Callers that
    keep activations in NHWC should use this directly and skip the NCHW relayouts.
    """
    N, H, W, C = x_nhwc.shape
    C_out = conv_w.shape[0]
    assert H % 2 == 0 and W % 2 == 0
    H2, W2 = H // 2, W // 2
    C2 = 2 * C
    C_out_pad = max(128, _round_up(C_out, 128))
    # Pad pooled width to a sublane multiple so in-kernel reshapes never cross
    # (8,128) tile boundaries; padded columns become garbage output sliced off below.
    W2p = _round_up(W2, 8)

    split_halves = (C % 128 == 0)
    matmul_dtype = jnp.bfloat16 if use_bf16_matmul else jnp.float32

    wt = jnp.transpose(conv_w).astype(jnp.float32)                  # (C_in, C_out)
    if split_halves:
        # Single-copy weight; 1/4 pool factor folded into the (positive-scale) affine.
        wmat = jnp.pad(wt, ((0, 0), (0, C_out_pad - C_out)))
        k_dim = C
        scale2 = 0.25 * jnp.tile(scale, 2).reshape(1, C2)
        shift2 = 0.25 * jnp.tile(shift, 2).reshape(1, C2)
    else:
        # Duplicated weight performs the horizontal 2-sum inside the matmul.
        wmat = 0.25 * jnp.concatenate([wt, wt], axis=0)             # (2C, C_out)
        wmat = jnp.pad(wmat, ((0, 0), (0, C_out_pad - C_out)))
        k_dim = C2
        scale2 = jnp.tile(scale, 2).reshape(1, C2)
        shift2 = jnp.tile(shift, 2).reshape(1, C2)
    wmat = wmat.astype(matmul_dtype)

    # (N, H, W, C) -> (N*H, W2p, 2C): identical element order to (pad-of-)NHWC, so the
    # pad + reshape fuse into the producing pass (no gather transpose).
    if W2p != W2:
        x_nhwc = jnp.pad(x_nhwc, ((0, 0), (0, 0), (0, 2 * (W2p - W2)), (0, 0)))
    xg = x_nhwc.reshape(N * H, W2p, C2)

    rows = N * H
    budget, vmem_limit = _vmem_budget_bytes()
    c2p = _round_up(C2, 128)
    trr, num_steps = _choose_row_tile(rows, W2p, c2p, C_out_pad, k_dim, budget)
    rows_pad = trr * num_steps
    if rows_pad != rows:
        # Zero-row padding -> garbage pooled rows, discarded below.  Keeps the tile
        # size near the VMEM optimum for awkward N*H.
        xg = jnp.pad(xg, ((0, rows_pad - rows), (0, 0), (0, 0)))

    kernel = functools.partial(_transition_kernel,
                               split_halves=split_halves,
                               half_c=C,
                               matmul_dtype=matmul_dtype)

    out = pl.pallas_call(
        kernel,
        out_shape=jax.ShapeDtypeStruct((rows_pad // 2, W2p, C_out_pad), jnp.float32),
        grid=(num_steps,),
        in_specs=[
            pl.BlockSpec((trr, W2p, C2), lambda i: (i, 0, 0)),
            pl.BlockSpec((1, C2), lambda i: (0, 0)),
            pl.BlockSpec((1, C2), lambda i: (0, 0)),
            pl.BlockSpec((k_dim, C_out_pad), lambda i: (0, 0)),
        ],
        out_specs=pl.BlockSpec((trr // 2, W2p, C_out_pad), lambda i: (i, 0, 0)),
        compiler_params=pltpu.CompilerParams(
            dimension_semantics=("parallel",),
            vmem_limit_bytes=vmem_limit,
        ),
    )(xg, scale2, shift2, wmat)

    # Drop row / width / channel padding; back to image layout (still NHWC).
    out = out[: N * H2].reshape(N, H2, W2p, C_out_pad)[:, :, :W2, :C_out]
    return out


# ---------------------------------------------------------------------------
# NCHW entry point (matches the PyTorch module layout)
# ---------------------------------------------------------------------------
def transition_layer(x_nchw, gamma, beta, conv_w, eps=1e-5, use_bf16_matmul=False):
    """x_nchw: (N, C_in, H, W) f32.  conv_w: (C_out, C_in) (PyTorch 1x1 weight squeezed).
    Training-mode BatchNorm2d (batch statistics, biased variance)."""
    x_nhwc = jnp.transpose(x_nchw, (0, 2, 3, 1))
    # Batch stats on the NHWC copy so the reduction fuses with the single relayout pass.
    mean = jnp.mean(x_nhwc, axis=(0, 1, 2))
    var = jnp.var(x_nhwc, axis=(0, 1, 2))
    scale = gamma * jax.lax.rsqrt(var + eps)
    shift = beta - mean * scale
    out_nhwc = transition_layer_nhwc(x_nhwc, scale, shift, conv_w,
                                     use_bf16_matmul=use_bf16_matmul)
    return jnp.transpose(out_nhwc, (0, 3, 1, 2))


# ---------------------------------------------------------------------------
# Pure-JAX reference (mirrors the PyTorch forward, NCHW)
# ---------------------------------------------------------------------------
def transition_reference(x, gamma, beta, conv_w, eps=1e-5):
    mean = jnp.mean(x, axis=(0, 2, 3), keepdims=True)
    var = jnp.var(x, axis=(0, 2, 3), keepdims=True)
    xn = (x - mean) / jnp.sqrt(var + eps)
    xn = xn * gamma.reshape(1, -1, 1, 1) + beta.reshape(1, -1, 1, 1)
    r = jnp.maximum(xn, 0.0)
    y = jnp.einsum('nchw,oc->nohw', r, conv_w)
    N, O, H, W = y.shape
    return y.reshape(N, O, H // 2, 2, W // 2, 2).mean(axis=(3, 5))


if __name__ == "__main__":
    key = jax.random.PRNGKey(0)
    k_x, k_g, k_b, k_w = jax.random.split(key, 4)

    N, C_in, H, W = 2, 4, 16, 16
    compression = 0.5
    C_out = int(C_in * compression)

    x = jax.random.normal(k_x, (N, C_in, H, W), dtype=jnp.float32)
    gamma = 1.0 + 0.1 * jax.random.normal(k_g, (C_in,), dtype=jnp.float32)
    beta = 0.1 * jax.random.normal(k_b, (C_in,), dtype=jnp.float32)
    conv_w = jax.random.normal(k_w, (C_out, C_in), dtype=jnp.float32) * 0.2

    out = jax.jit(transition_layer)(x, gamma, beta, conv_w)
    out = jax.block_until_ready(out)

    ref = transition_reference(x, gamma, beta, conv_w)
    assert out.shape == (N, C_out, H // 2, W // 2)
    assert jnp.allclose(out, ref, atol=1e-5, rtol=1e-5)

    print("KERNEL_OK")
</pallas_src>

<mosaic_0001>
module attributes {stable_mosaic.version = 11 : i64} {
  func.func @_transition_kernel(%arg0: i32, %arg1: memref<32x8x8xf32, #tpu.memory_space<vmem>>, %arg2: memref<1x8xf32, #tpu.memory_space<vmem>>, %arg3: memref<1x8xf32, #tpu.memory_space<vmem>>, %arg4: memref<8x128xf32, #tpu.memory_space<vmem>>, %arg5: memref<16x8x128xf32, #tpu.memory_space<vmem>>) attributes {dimension_semantics = [#tpu.dimension_semantics<parallel>], iteration_bounds = array<i64: 1>, scalar_prefetch = 0 : i64, scratch_operands = 0 : i64, tpu.core_type = #tpu.core_type<tc>, window_params = [{transform_indices = @transform_0, window_bounds = array<i64: 32, 8, 8>}, {pipeline_mode = #tpu.pipeline_mode<synchronous>, transform_indices = @transform_1, window_bounds = array<i64: 1, 8>}, {pipeline_mode = #tpu.pipeline_mode<synchronous>, transform_indices = @transform_2, window_bounds = array<i64: 1, 8>}, {pipeline_mode = #tpu.pipeline_mode<synchronous>, transform_indices = @transform_3, window_bounds = array<i64: 8, 128>}, {transform_indices = @transform_4, window_bounds = array<i64: 16, 8, 128>}]} {
    %c0 = arith.constant 0 : index
    %c0_0 = arith.constant 0 : index
    %c0_1 = arith.constant 0 : index
    %0 = vector.load %arg1[%c0, %c0_0, %c0_1] : memref<32x8x8xf32, #tpu.memory_space<vmem>>, vector<32x8x8xf32>
    %c0_2 = arith.constant 0 : index
    %c0_3 = arith.constant 0 : index
    %1 = vector.load %arg2[%c0_2, %c0_3] : memref<1x8xf32, #tpu.memory_space<vmem>>, vector<1x8xf32>
    %2 = vector.shape_cast %1 : vector<1x8xf32> to vector<1x1x8xf32>
    %3 = vector.broadcast %2 : vector<1x1x8xf32> to vector<32x8x8xf32>
    %4 = arith.mulf %0, %3 : vector<32x8x8xf32>
    %c0_4 = arith.constant 0 : index
    %c0_5 = arith.constant 0 : index
    %5 = vector.load %arg3[%c0_4, %c0_5] : memref<1x8xf32, #tpu.memory_space<vmem>>, vector<1x8xf32>
    %6 = vector.shape_cast %5 : vector<1x8xf32> to vector<1x1x8xf32>
    %7 = vector.broadcast %6 : vector<1x1x8xf32> to vector<32x8x8xf32>
    %8 = arith.addf %4, %7 : vector<32x8x8xf32>
    %cst = arith.constant 0.000000e+00 : f32
    %9 = vector.broadcast %cst : f32 to vector<32x8x8xf32>
    %10 = arith.maximumf %8, %9 : vector<32x8x8xf32>
    %11 = vector.shape_cast %10 : vector<32x8x8xf32> to vector<16x2x8x8xf32>
    %12 = vector.extract_strided_slice %11 {offsets = [0, 0, 0, 0], sizes = [16, 1, 8, 8], strides = [1, 1, 1, 1]} : vector<16x2x8x8xf32> to vector<16x1x8x8xf32>
    %13 = vector.shape_cast %12 : vector<16x1x8x8xf32> to vector<16x8x8xf32>
    %14 = vector.extract_strided_slice %11 {offsets = [0, 1, 0, 0], sizes = [16, 1, 8, 8], strides = [1, 1, 1, 1]} : vector<16x2x8x8xf32> to vector<16x1x8x8xf32>
    %15 = vector.shape_cast %14 : vector<16x1x8x8xf32> to vector<16x8x8xf32>
    %16 = arith.addf %13, %15 : vector<16x8x8xf32>
    %17 = vector.shape_cast %16 : vector<16x8x8xf32> to vector<128x8xf32>
    %c0_6 = arith.constant 0 : index
    %c0_7 = arith.constant 0 : index
    %18 = vector.load %arg4[%c0_6, %c0_7] : memref<8x128xf32, #tpu.memory_space<vmem>>, vector<8x128xf32>
    %cst_8 = arith.constant dense<0.000000e+00> : vector<128x128xf32>
    %19 = tpu.matmul %17, %18, %cst_8 {dimension_numbers = #tpu.dot_dimension_numbers<[1], [0], [0], [1], [0, 0, 1, 1], [], []>} : vector<128x8xf32>, vector<8x128xf32>, vector<128x128xf32> -> vector<128x128xf32>
    %20 = vector.shape_cast %19 : vector<128x128xf32> to vector<16x8x128xf32>
    %c0_9 = arith.constant 0 : index
    %c0_10 = arith.constant 0 : index
    %c0_11 = arith.constant 0 : index
    %21 = vector.load %arg5[%c0_9, %c0_10, %c0_11] : memref<16x8x128xf32, #tpu.memory_space<vmem>>, vector<16x8x128xf32>
    tpu.vector_store %arg5[%c0_9, %c0_10, %c0_11], %20 {strides = array<i32>} : memref<16x8x128xf32, #tpu.memory_space<vmem>>, vector<16x8x128xf32>,
    return
  }
  func.func @transform_0(%arg0: i32) -> (i32, i32, i32) {
    %c0_i32 = arith.constant 0 : i32
    %c0_i32_0 = arith.constant 0 : i32
    %c0_i32_1 = arith.constant 0 : i32
    return %arg0, %c0_i32, %c0_i32_0 : i32, i32, i32
  }
  func.func @transform_1(%arg0: i32) -> (i32, i32) {
    %c0_i32 = arith.constant 0 : i32
    %c0_i32_0 = arith.constant 0 : i32
    %c0_i32_1 = arith.constant 0 : i32
    return %c0_i32, %c0_i32_0 : i32, i32
  }
  func.func @transform_2(%arg0: i32) -> (i32, i32) {
    %c0_i32 = arith.constant 0 : i32
    %c0_i32_0 = arith.constant 0 : i32
    %c0_i32_1 = arith.constant 0 : i32
    return %c0_i32, %c0_i32_0 : i32, i32
  }
  func.func @transform_3(%arg0: i32) -> (i32, i32) {
    %c0_i32 = arith.constant 0 : i32
    %c0_i32_0 = arith.constant 0 : i32
    %c0_i32_1 = arith.constant 0 : i32
    return %c0_i32, %c0_i32_0 : i32, i32
  }
  func.func @transform_4(%arg0: i32) -> (i32, i32, i32) {
    %c0_i32 = arith.constant 0 : i32
    %c0_i32_0 = arith.constant 0 : i32
    %c0_i32_1 = arith.constant 0 : i32
    return %arg0, %c0_i32, %c0_i32_0 : i32, i32, i32
  }
}

</mosaic_0001>

<llo_original>
// kernel: tile.18
$region0: #{tile.18}
  #allocation0 [shape = 's32[1]{0}', space=sflag, size = 0x4, scoped, tag = 'scoped memory for tile.18']
  %s0 = inlined_call_operand.vmem [shape: f32[4], index: 0, kind: input, shape index: {}]
  %s1 = inlined_call_operand.vmem [shape: f32[2,4], index: 1, kind: output, shape index: {}]
  // Predicated region
  $region2: #{tile.18} parent=0 // pred_check
    _
  $region3: #{tile.18} parent=0 // pred_check_branch
    %3 = sbr.rel (0) target = $region5
  $region4: #{tile.18} parent=0 // pred_region
    _
  $region5: #{tile.18} parent=0 // pred_fallthru
    _
  %v4 = vld [vmem:[%s0] ss:$0 sm:$0xff]
  %5 = vst [vmem:[%s1] sm:$0x3] %v4

// kernel: tile.19
$region0: #{tile.19}
  %s0 = inlined_call_operand.vmem [shape: f32[2,4], index: 0, kind: input, shape index: {}]
  %s1 = inlined_call_operand.vmem [shape: f32[1,8], index: 1, kind: output, shape index: {}]
  $region1: #{tile.19} parent=0
    #allocation0 [shape = 'u8[4096]{0}', space=vmem, size = 0x1000, scoped, tag = 'scoped mem for output reshape']
    #allocation1 [shape = 'u8[4096]{0}', space=vmem, size = 0x1000, scoped, tag = 'scoped mem for input reshape']
    %s3 = sshll.u32 1, 2
    %s4 = ssub.s32 %s3, 1
    %v5 = vld [vmem:[%s0] sm:%s4]
    %6 = vst [vmem:[#allocation1] sm:%s4] %v5
    %v7 = vld [vmem:[#allocation1] sm:$0x1]
    %vm8 = vcmask 31744
    %9 = vst.msk [vmem:[#allocation0] sm:$0x1] %vm8, %v7
    %s10 = scalar_lea.vmem [#allocation1], 1
    %v11 = vld [vmem:[%s10] sm:$0x1]
    %12 = vrot.lane.b32.xlu0 %v11, 4
    %v13 = vpop.permute.xlu0 %12
    %vm14 = vcmask 64544
    %15 = vst.msk [vmem:[#allocation0] sm:$0x1] %vm14, %v13
    %s17 = sshll.u32 1, 1
    %s18 = ssub.s32 %s17, 1
    %v20 = vld [vmem:[#allocation0] sm:%s18]
    %s21 = sshll.u32 1, 1
    %s22 = ssub.s32 %s21, 1
    %23 = vst [vmem:[%s1] sm:%s22] %v20

// kernel: transition_layer.1
$region0: #{transition_layer.1}
  #allocation0 [shape = 'u32[]', space=smem, size = 0x4, offset = 0x4, fixed_abs, tag = 'smem constant byte address 0x4 - core index']
  #allocation1 [shape = 'u32[144,128]{1,0:T(1,128)}', space=vmem, size = 0x12000, scoped, tag = 'internal scratch']
  %s0 = inlined_call_operand.vmem [shape: f32[32,8,8], index: 0, kind: input, shape index: {}]
  %s1 = inlined_call_operand.vmem [shape: f32[1,8], index: 1, kind: input, shape index: {}]
  %s2 = inlined_call_operand.vmem [shape: f32[1,8], index: 2, kind: input, shape index: {}]
  %s3 = inlined_call_operand.vmem [shape: f32[8,128], index: 3, kind: input, shape index: {}]
  %s4 = inlined_call_operand.vmem [shape: f32[16,8,128], index: 4, kind: output, shape index: {}]
  %s5 = sld [smem:[#allocation0]]
  $region26: #{transition_layer.1} parent=0
    _
  %s7 = ssub.s32 1, %s5
  %s8 = scalar_select 0, %s7, %s5
  // Predicated region
  $region2: #{transition_layer.1} parent=0 // pred_check
    _
  $region3: #{transition_layer.1} parent=0 // pred_check_branch
    %10 = sbr.rel (0) target = $region5
  $region4: #{transition_layer.1} parent=0 // pred_region
    _
  $region5: #{transition_layer.1} parent=0 // pred_fallthru
    _
  // Predicated region
  $region6: #{transition_layer.1} parent=0 // pred_check
    _
  $region7: #{transition_layer.1} parent=0 // pred_check_branch
    %12 = sbr.rel (0) target = $region9
  $region8: #{transition_layer.1} parent=0 // pred_region
    _
  $region9: #{transition_layer.1} parent=0 // pred_fallthru
    _
  // Predicated region
  $region10: #{transition_layer.1} parent=0 // pred_check
    _
  $region11: #{transition_layer.1} parent=0 // pred_check_branch
    %14 = sbr.rel (0) target = $region13
  $region12: #{transition_layer.1} parent=0 // pred_region
    _
  $region13: #{transition_layer.1} parent=0 // pred_fallthru
    _
  // Predicated region
  $region14: #{transition_layer.1} parent=0 // pred_check
    _
  $region15: #{transition_layer.1} parent=0 // pred_check_branch
    %16 = sbr.rel (0) target = $region17
  $region16: #{transition_layer.1} parent=0 // pred_region
    _
  $region17: #{transition_layer.1} parent=0 // pred_fallthru
    _
  %v17 = vld [vmem:[%s0] sm:$0xff]
  %v18 = vld [vmem:[%s0 + $0x8] sm:$0xff]
  %v19 = vld [vmem:[%s0 + $0x10] sm:$0xff]
  %v20 = vld [vmem:[%s0 + $0x18] sm:$0xff]
  %v21 = vld [vmem:[%s0 + $0x20] sm:$0xff]
  %v22 = vld [vmem:[%s0 + $0x28] sm:$0xff]
  %v23 = vld [vmem:[%s0 + $0x30] sm:$0xff]
  %v24 = vld [vmem:[%s0 + $0x38] sm:$0xff]
  %v25 = vld [vmem:[%s0 + $0x40] sm:$0xff]
  %v26 = vld [vmem:[%s0 + $0x48] sm:$0xff]
  %v27 = vld [vmem:[%s0 + $0x50] sm:$0xff]
  %v28 = vld [vmem:[%s0 + $0x58] sm:$0xff]
  %v29 = vld [vmem:[%s0 + $0x60] sm:$0xff]
  %v30 = vld [vmem:[%s0 + $0x68] sm:$0xff]
  %v31 = vld [vmem:[%s0 + $0x70] sm:$0xff]
  %v32 = vld [vmem:[%s0 + $0x78] sm:$0xff]
  %v33 = vld [vmem:[%s0 + $0x80] sm:$0xff]
  %v34 = vld [vmem:[%s0 + $0x88] sm:$0xff]
  %v35 = vld [vmem:[%s0 + $0x90] sm:$0xff]
  %v36 = vld [vmem:[%s0 + $0x98] sm:$0xff]
  %v37 = vld [vmem:[%s0 + $0xa0] sm:$0xff]
  %v38 = vld [vmem:[%s0 + $0xa8] sm:$0xff]
  %v39 = vld [vmem:[%s0 + $0xb0] sm:$0xff]
  %v40 = vld [vmem:[%s0 + $0xb8] sm:$0xff]
  %v41 = vld [vmem:[%s0 + $0xc0] sm:$0xff]
  %v42 = vld [vmem:[%s0 + $0xc8] sm:$0xff]
  %v43 = vld [vmem:[%s0 + $0xd0] sm:$0xff]
  %v44 = vld [vmem:[%s0 + $0xd8] sm:$0xff]
  %v45 = vld [vmem:[%s0 + $0xe0] sm:$0xff]
  %v46 = vld [vmem:[%s0 + $0xe8] sm:$0xff]
  %v47 = vld [vmem:[%s0 + $0xf0] sm:$0xff]
  %v48 = vld [vmem:[%s0 + $0xf8] sm:$0xff]
  %v49 = vld [vmem:[%s1] sm:$0x1]
  %v51 = vlaneseq
  %v52 = vshrl.u32 %v51, 7
  %v53 = vsub.s32 0, %v52
  %v54 = vrot.slane %v49, %v53
  %v56 = vmul.f32 %v17, %v54
  %v57 = vmul.f32 %v18, %v54
  %v58 = vmul.f32 %v19, %v54
  %v59 = vmul.f32 %v20, %v54
  %v60 = vmul.f32 %v21, %v54
  %v61 = vmul.f32 %v22, %v54
  %v62 = vmul.f32 %v23, %v54
  %v63 = vmul.f32 %v24, %v54
  %v64 = vmul.f32 %v25, %v54
  %v65 = vmul.f32 %v26, %v54
  %v66 = vmul.f32 %v27, %v54
  %v67 = vmul.f32 %v28, %v54
  %v68 = vmul.f32 %v29, %v54
  %v69 = vmul.f32 %v30, %v54
  %v70 = vmul.f32 %v31, %v54
  %v71 = vmul.f32 %v32, %v54
  %v72 = vmul.f32 %v33, %v54
  %v73 = vmul.f32 %v34, %v54
  %v74 = vmul.f32 %v35, %v54
  %v75 = vmul.f32 %v36, %v54
  %v76 = vmul.f32 %v37, %v54
  %v77 = vmul.f32 %v38, %v54
  %v78 = vmul.f32 %v39, %v54
  %v79 = vmul.f32 %v40, %v54
  %v80 = vmul.f32 %v41, %v54
  %v81 = vmul.f32 %v42, %v54
  %v82 = vmul.f32 %v43, %v54
  %v83 = vmul.f32 %v44, %v54
  %v84 = vmul.f32 %v45, %v54
  %v85 = vmul.f32 %v46, %v54
  %v86 = vmul.f32 %v47, %v54
  %v87 = vmul.f32 %v48, %v54
  %v88 = vld [vmem:[%s2] sm:$0x1]
  %v90 = vlaneseq
  %v91 = vshrl.u32 %v90, 7
  %v92 = vsub.s32 0, %v91
  %v93 = vrot.slane %v88, %v92
  %v95 = vadd.f32 %v56, %v93
  %v96 = vadd.f32 %v57, %v93
  %v97 = vadd.f32 %v58, %v93
  %v98 = vadd.f32 %v59, %v93
  %v99 = vadd.f32 %v60, %v93
  %v100 = vadd.f32 %v61, %v93
  %v101 = vadd.f32 %v62, %v93
  %v102 = vadd.f32 %v63, %v93
  %v103 = vadd.f32 %v64, %v93
  %v104 = vadd.f32 %v65, %v93
  %v105 = vadd.f32 %v66, %v93
  %v106 = vadd.f32 %v67, %v93
  %v107 = vadd.f32 %v68, %v93
  %v108 = vadd.f32 %v69, %v93
  %v109 = vadd.f32 %v70, %v93
  %v110 = vadd.f32 %v71, %v93
  %v111 = vadd.f32 %v72, %v93
  %v112 = vadd.f32 %v73, %v93
  %v113 = vadd.f32 %v74, %v93
  %v114 = vadd.f32 %v75, %v93
  %v115 = vadd.f32 %v76, %v93
  %v116 = vadd.f32 %v77, %v93
  %v117 = vadd.f32 %v78, %v93
  %v118 = vadd.f32 %v79, %v93
  %v119 = vadd.f32 %v80, %v93
  %v120 = vadd.f32 %v81, %v93
  %v121 = vadd.f32 %v82, %v93
  %v122 = vadd.f32 %v83, %v93
  %v123 = vadd.f32 %v84, %v93
  %v124 = vadd.f32 %v85, %v93
  %v125 = vadd.f32 %v86, %v93
  %v126 = vadd.f32 %v87, %v93
  %v127 = vmax.f32 %v95, 0.0
  %v128 = vmax.f32 %v96, 0.0
  %v129 = vmax.f32 %v97, 0.0
  %v130 = vmax.f32 %v98, 0.0
  %v131 = vmax.f32 %v99, 0.0
  %v132 = vmax.f32 %v100, 0.0
  %v133 = vmax.f32 %v101, 0.0
  %v134 = vmax.f32 %v102, 0.0
  %v135 = vmax.f32 %v103, 0.0
  %v136 = vmax.f32 %v104, 0.0
  %v137 = vmax.f32 %v105, 0.0
  %v138 = vmax.f32 %v106, 0.0
  %v139 = vmax.f32 %v107, 0.0
  %v140 = vmax.f32 %v108, 0.0
  %v141 = vmax.f32 %v109, 0.0
  %v142 = vmax.f32 %v110, 0.0
  %v143 = vmax.f32 %v111, 0.0
  %v144 = vmax.f32 %v112, 0.0
  %v145 = vmax.f32 %v113, 0.0
  %v146 = vmax.f32 %v114, 0.0
  %v147 = vmax.f32 %v115, 0.0
  %v148 = vmax.f32 %v116, 0.0
  %v149 = vmax.f32 %v117, 0.0
  %v150 = vmax.f32 %v118, 0.0
  %v151 = vmax.f32 %v119, 0.0
  %v152 = vmax.f32 %v120, 0.0
  %v153 = vmax.f32 %v121, 0.0
  %v154 = vmax.f32 %v122, 0.0
  %v155 = vmax.f32 %v123, 0.0
  %v156 = vmax.f32 %v124, 0.0
  %v157 = vmax.f32 %v125, 0.0
  %v158 = vmax.f32 %v126, 0.0
  %v159 = vadd.f32 %v127, %v128
  %v160 = vadd.f32 %v129, %v130
  %v161 = vadd.f32 %v131, %v132
  %v162 = vadd.f32 %v133, %v134
  %v163 = vadd.f32 %v135, %v136
  %v164 = vadd.f32 %v137, %v138
  %v165 = vadd.f32 %v139, %v140
  %v166 = vadd.f32 %v141, %v142
  %v167 = vadd.f32 %v143, %v144
  %v168 = vadd.f32 %v145, %v146
  %v169 = vadd.f32 %v147, %v148
  %v170 = vadd.f32 %v149, %v150
  %v171 = vadd.f32 %v151, %v152
  %v172 = vadd.f32 %v153, %v154
  %v173 = vadd.f32 %v155, %v156
  %v174 = vadd.f32 %v157, %v158
  %v175 = vld [vmem:[%s3] sm:$0xff]
  %vm176 = vcmask 64512
  %v178 = vsel %vm176, %v159, 0
  %v181 = vsel %vm176, %v160, 0
  %v184 = vsel %vm176, %v161, 0
  %v187 = vsel %vm176, %v162, 0
  %v190 = vsel %vm176, %v163, 0
  %v193 = vsel %vm176, %v164, 0
  %v196 = vsel %vm176, %v165, 0
  %v199 = vsel %vm176, %v166, 0
  %v202 = vsel %vm176, %v167, 0
  %v205 = vsel %vm176, %v168, 0
  %v208 = vsel %vm176, %v169, 0
  %v211 = vsel %vm176, %v170, 0
  %v214 = vsel %vm176, %v171, 0
  %v217 = vsel %vm176, %v172, 0
  %v220 = vsel %vm176, %v173, 0
  %v223 = vsel %vm176, %v174, 0
  %225 = vmatprep.subr.mxu0 0.0
  %226 = vmatpush1.msra.mxu0 0.0
  %227 = vmatprep.subr.mxu0 0.0
  %228 = vmatpush1.msra.mxu0 0.0
  %229 = vmatprep.subr.mxu0 0.0
  %230 = vmatpush1.msra.mxu0 0.0
  %231 = vmatprep.subr.mxu0 0.0
  %232 = vmatpush1.msra.mxu0 0.0
  %233 = vmatprep.subr.mxu0 0.0
  %234 = vmatpush1.msra.mxu0 0.0
  %235 = vmatprep.subr.mxu0 0.0
  %236 = vmatpush1.msra.mxu0 0.0
  %237 = vmatprep.subr.mxu0 0.0
  %238 = vmatpush1.msra.mxu0 0.0
  %239 = vmatprep.subr.mxu0 0.0
  %240 = vmatpush1.msra.mxu0 0.0
  %241 = vmatprep.subr.mxu0 0.0
  %242 = vmatpush1.msra.mxu0 0.0
  %243 = vmatprep.subr.mxu0 0.0
  %244 = vmatpush1.msra.mxu0 0.0
  %245 = vmatprep.subr.mxu0 0.0
  %246 = vmatpush1.msra.mxu0 0.0
  %247 = vmatprep.subr.mxu0 0.0
  %248 = vmatpush1.msra.mxu0 0.0
  %249 = vmatprep.subr.mxu0 0.0
  %250 = vmatpush1.msra.mxu0 0.0
  %251 = vmatprep.subr.mxu0 0.0
  %252 = vmatpush1.msra.mxu0 0.0
  %253 = vmatprep.subr.mxu0 0.0
  %254 = vmatpush1.msra.mxu0 0.0
  %255 = vmatprep.subr.mxu0 0.0
  %256 = vmatpush1.msra.mxu0 %v175
  %257 = vmatprep.subr.mxu0 0.0
  %258 = vmatpush2.msra.mxu0 0.0
  %259 = vmatprep.subr.mxu0 0.0
  %260 = vmatpush2.msra.mxu0 0.0
  %261 = vmatprep.subr.mxu0 0.0
  %262 = vmatpush2.msra.mxu0 0.0
  %263 = vmatprep.subr.mxu0 0.0
  %264 = vmatpush2.msra.mxu0 0.0
  %265 = vmatprep.subr.mxu0 0.0
  %266 = vmatpush2.msra.mxu0 0.0
  %267 = vmatprep.subr.mxu0 0.0
  %268 = vmatpush2.msra.mxu0 0.0
  %269 = vmatprep.subr.mxu0 0.0
  %270 = vmatpush2.msra.mxu0 0.0
  %271 = vmatprep.subr.mxu0 0.0
  %272 = vmatpush2.msra.mxu0 0.0
  %273 = vmatprep.subr.mxu0 0.0
  %274 = vmatpush2.msra.mxu0 0.0
  %275 = vmatprep.subr.mxu0 0.0
  %276 = vmatpush2.msra.mxu0 0.0
  %277 = vmatprep.subr.mxu0 0.0
  %278 = vmatpush2.msra.mxu0 0.0
  %279 = vmatprep.subr.mxu0 0.0
  %280 = vmatpush2.msra.mxu0 0.0
  %281 = vmatprep.subr.mxu0 0.0
  %282 = vmatpush2.msra.mxu0 0.0
  %283 = vmatprep.subr.mxu0 0.0
  %284 = vmatpush2.msra.mxu0 0.0
  %285 = vmatprep.subr.mxu0 0.0
  %286 = vmatpush2.msra.mxu0 0.0
  %287 = vmatprep.subr.mxu0 0.0
  %288 = vmatpush2.msra.mxu0 0.0
  %289 = vmatprep.mubr.f32.mxu0 0.0
  %290 = vmatmul.mubr.f32.gmra.mxu0 %v178
  %v291 = vpop.f32.mrf.mxu0
  %v292 = vadd.f32 0.0, %v291
  %v293 = vpop.f32.mrf.mxu0
  %294 = vmatprep.mubr.f32.mxu0 0.0
  %295 = vmatmul.mubr.f32.gmra.mxu0 %v181
  %v296 = vpop.f32.mrf.mxu0
  %v297 = vadd.f32 0.0, %v296
  %v298 = vpop.f32.mrf.mxu0
  %299 = vmatprep.mubr.f32.mxu0 0.0
  %300 = vmatmul.mubr.f32.gmra.mxu0 %v184
  %v301 = vpop.f32.mrf.mxu0
  %v302 = vadd.f32 0.0, %v301
  %v303 = vpop.f32.mrf.mxu0
  %304 = vmatprep.mubr.f32.mxu0 0.0
  %305 = vmatmul.mubr.f32.gmra.mxu0 %v187
  %v306 = vpop.f32.mrf.mxu0
  %v307 = vadd.f32 0.0, %v306
  %v308 = vpop.f32.mrf.mxu0
  %309 = vmatprep.mubr.f32.mxu0 0.0
  %310 = vmatmul.mubr.f32.gmra.mxu0 %v190
  %v311 = vpop.f32.mrf.mxu0
  %v312 = vadd.f32 0.0, %v311
  %v313 = vpop.f32.mrf.mxu0
  %314 = vmatprep.mubr.f32.mxu0 0.0
  %315 = vmatmul.mubr.f32.gmra.mxu0 %v193
  %v316 = vpop.f32.mrf.mxu0
  %v317 = vadd.f32 0.0, %v316
  %v318 = vpop.f32.mrf.mxu0
  %319 = vmatprep.mubr.f32.mxu0 0.0
  %320 = vmatmul.mubr.f32.gmra.mxu0 %v196
  %v321 = vpop.f32.mrf.mxu0
  %v322 = vadd.f32 0.0, %v321
  %v323 = vpop.f32.mrf.mxu0
  %324 = vmatprep.mubr.f32.mxu0 0.0
  %325 = vmatmul.mubr.f32.gmra.mxu0 %v199
  %v326 = vpop.f32.mrf.mxu0
  %v327 = vadd.f32 0.0, %v326
  %v328 = vpop.f32.mrf.mxu0
  %329 = vmatprep.mubr.f32.mxu0 0.0
  %330 = vmatmul.mubr.f32.gmra.mxu0 %v202
  %v331 = vpop.f32.mrf.mxu0
  %v332 = vadd.f32 0.0, %v331
  %v333 = vpop.f32.mrf.mxu0
  %334 = vmatprep.mubr.f32.mxu0 0.0
  %335 = vmatmul.mubr.f32.gmra.mxu0 %v205
  %v336 = vpop.f32.mrf.mxu0
  %v337 = vadd.f32 0.0, %v336
  %v338 = vpop.f32.mrf.mxu0
  %339 = vmatprep.mubr.f32.mxu0 0.0
  %340 = vmatmul.mubr.f32.gmra.mxu0 %v208
  %v341 = vpop.f32.mrf.mxu0
  %v342 = vadd.f32 0.0, %v341
  %v343 = vpop.f32.mrf.mxu0
  %344 = vmatprep.mubr.f32.mxu0 0.0
  %345 = vmatmul.mubr.f32.gmra.mxu0 %v211
  %v346 = vpop.f32.mrf.mxu0
  %v347 = vadd.f32 0.0, %v346
  %v348 = vpop.f32.mrf.mxu0
  %349 = vmatprep.mubr.f32.mxu0 0.0
  %350 = vmatmul.mubr.f32.gmra.mxu0 %v214
  %v351 = vpop.f32.mrf.mxu0
  %v352 = vadd.f32 0.0, %v351
  %v353 = vpop.f32.mrf.mxu0
  %354 = vmatprep.mubr.f32.mxu0 0.0
  %355 = vmatmul.mubr.f32.gmra.mxu0 %v217
  %v356 = vpop.f32.mrf.mxu0
  %v357 = vadd.f32 0.0, %v356
  %v358 = vpop.f32.mrf.mxu0
  %359 = vmatprep.mubr.f32.mxu0 0.0
  %360 = vmatmul.mubr.f32.gmra.mxu0 %v220
  %v361 = vpop.f32.mrf.mxu0
  %v362 = vadd.f32 0.0, %v361
  %v363 = vpop.f32.mrf.mxu0
  %364 = vmatprep.mubr.f32.mxu0 0.0
  %365 = vmatmul.mubr.f32.gmra.mxu0 %v223
  %v366 = vpop.f32.mrf.mxu0
  %v367 = vadd.f32 0.0, %v366
  %v368 = vpop.f32.mrf.mxu0
  %369 = vdwg.mxu0
  %370 = vst [vmem:[%s4] sm:$0xff] %v292
  %371 = vst [vmem:[%s4 + $0x8] sm:$0xff] %v297
  %372 = vst [vmem:[%s4 + $0x10] sm:$0xff] %v302
  %373 = vst [vmem:[%s4 + $0x18] sm:$0xff] %v307
  %374 = vst [vmem:[%s4 + $0x20] sm:$0xff] %v312
  %375 = vst [vmem:[%s4 + $0x28] sm:$0xff] %v317
  %376 = vst [vmem:[%s4 + $0x30] sm:$0xff] %v322
  %377 = vst [vmem:[%s4 + $0x38] sm:$0xff] %v327
  %378 = vst [vmem:[%s4 + $0x40] sm:$0xff] %v332
  %379 = vst [vmem:[%s4 + $0x48] sm:$0xff] %v337
  %380 = vst [vmem:[%s4 + $0x50] sm:$0xff] %v342
  %381 = vst [vmem:[%s4 + $0x58] sm:$0xff] %v347
  %382 = vst [vmem:[%s4 + $0x60] sm:$0xff] %v352
  %383 = vst [vmem:[%s4 + $0x68] sm:$0xff] %v357
  %384 = vst [vmem:[%s4 + $0x70] sm:$0xff] %v362
  %385 = vst [vmem:[%s4 + $0x78] sm:$0xff] %v367
  // Predicated region
  $region18: #{transition_layer.1} parent=0 // pred_check
    _
  $region19: #{transition_layer.1} parent=0 // pred_check_branch
    %387 = sbr.rel (0) target = $region21
  $region20: #{transition_layer.1} parent=0 // pred_region
    _
  $region21: #{transition_layer.1} parent=0 // pred_fallthru
    _
  // Predicated region
  $region22: #{transition_layer.1} parent=0 // pred_check
    _
  $region23: #{transition_layer.1} parent=0 // pred_check_branch
    %389 = sbr.rel (0) target = $region25
  $region24: #{transition_layer.1} parent=0 // pred_region
    _
  $region25: #{transition_layer.1} parent=0 // pred_fallthru
    _

</llo_original>
